<compile_context>
chip_gen: v7x
topology: tpu7x:2x2x1
jax: 0.10.0
libtpu: 0.0.40
codegen_flags: <defaults>
</compile_context>

<pallas_src>
import functools

import jax
import jax.numpy as jnp
from jax.experimental import pallas as pl
from jax.experimental.pallas import tpu as pltpu


def _tpu_vmem_capacity_bytes():
    try:
        info = pltpu.get_tpu_info()
        for name in ("vmem_capacity_bytes", "vmem_size_bytes", "vmem_bytes"):
            v = getattr(info, name, None)
            if v:
                return int(v)
    except Exception:
        pass
    return 128 * 1024 * 1024  # v5e / v6e default


_VMEM_CAPACITY = _tpu_vmem_capacity_bytes()
# Stay well below physical VMEM (v7x: 64 MiB -> 48 MiB; v5e/v6e: 128 -> 96).
_VMEM_LIMIT = (_VMEM_CAPACITY * 3) // 4
# Block-byte target: bigger blocks on v7x (per-step overhead matters more at
# ~3.2 TB/s); modest blocks already hit ~85% of HBM BW on v5e/v6e.
if _VMEM_CAPACITY <= 64 * 1024 * 1024:          # v7x-class (64 MiB VMEM)
    _TARGET_BLOCK_BYTES = 6 * 1024 * 1024
else:                                            # v5e / v6e (128 MiB VMEM)
    _TARGET_BLOCK_BYTES = 4 * 1024 * 1024
# in + out blocks, double-buffered (~4x one block) + headroom must fit.
_TARGET_BLOCK_BYTES = min(_TARGET_BLOCK_BYTES, max(256 * 1024, _VMEM_LIMIT // 6))


def _sum_over(x, axes):
    """Sequential single-axis reductions (lane first) — robust Mosaic lowering."""
    for a in sorted(axes, reverse=True):
        x = jnp.sum(x, axis=a, keepdims=True)
    return x


def _norm_kernel(x_ref, g_ref, b_ref, o_ref, *, reduce_axes, inv_count, eps):
    """Generic normalization tile.

    Two-pass (centered) mean/variance over `reduce_axes` (all of which are
    fully contained in the block), rsqrt on the EUP, folded scale/shift.
    """
    x = x_ref[...].astype(jnp.float32)
    mean = _sum_over(x, reduce_axes) * inv_count
    d = x - mean
    # Centered second pass: avoids E[x^2] - mean^2 cancellation; VALU-only.
    var = _sum_over(d * d, reduce_axes) * inv_count
    inv_std = jax.lax.rsqrt(var + eps)                    # EUP slot (~free)
    scale = g_ref[...].astype(jnp.float32) * inv_std      # per-stat-group/channel
    shift = b_ref[...].astype(jnp.float32)
    o_ref[...] = (d * scale + shift).astype(o_ref.dtype)  # 1 mul + 1 add / elem


def _pick_grid_tile(extent, per_unit_bytes, *, sublane=False):
    """Tile size along the single (parallel) grid axis.

    Sized so one input block ~= the generation block-byte target, capped so
    the grid has >= 2 programs whenever possible (both v7x TensorCores busy;
    harmless on single-TC v5e/v6e).  If the tiled axis sits in the sublane
    (second-to-last) position it must be a multiple of 8 or span the axis.
    """
    t = max(1, _TARGET_BLOCK_BYTES // max(int(per_unit_bytes), 1))
    if extent >= 2:
        t = min(t, (extent + 1) // 2)   # >= 2 grid programs when possible
    t = max(1, min(t, extent))
    if not sublane or t == extent:
        return t
    if extent <= 8:
        return extent                   # full axis (allowed even if not %8)
    return max(8, (t // 8) * 8)         # multiple of 8, partial tail handled by cdiv


def _run_norm(x, gamma, beta, *, axis, tile, reduce_axes, count, eps, gamma_tiled):
    """Normalize `x` tiling the (non-reduced) `axis`; all other axes full."""
    shape = x.shape
    ndim = x.ndim
    grid = (pl.cdiv(shape[axis], tile),)

    x_block = tuple(tile if a == axis else shape[a] for a in range(ndim))

    def x_map(i, _axis=axis, _nd=ndim):
        return tuple(i if a == _axis else 0 for a in range(_nd))

    g_shape = gamma.shape
    g_block = tuple(tile if (a == axis and gamma_tiled) else g_shape[a]
                    for a in range(ndim))

    def g_map(i, _axis=axis, _nd=ndim, _tiled=gamma_tiled):
        return tuple(i if (a == _axis and _tiled) else 0 for a in range(_nd))

    kernel = functools.partial(_norm_kernel, reduce_axes=reduce_axes,
                               inv_count=1.0 / float(count), eps=float(eps))

    nbytes = x.size * x.dtype.itemsize
    cost = pl.CostEstimate(flops=int(8 * x.size),
                           transcendentals=int(x.size // max(count, 1)),
                           bytes_accessed=int(2 * nbytes))

    return pl.pallas_call(
        kernel,
        out_shape=jax.ShapeDtypeStruct(shape, x.dtype),
        grid=grid,
        in_specs=[pl.BlockSpec(x_block, x_map),
                  pl.BlockSpec(g_block, g_map),
                  pl.BlockSpec(g_block, g_map)],
        out_specs=pl.BlockSpec(x_block, x_map),
        compiler_params=pltpu.CompilerParams(
            dimension_semantics=("parallel",),
            vmem_limit_bytes=_VMEM_LIMIT),
        cost_estimate=cost,
    )(x, gamma, beta)


class Normalization:
    """Pallas port of resnet1d.Normalization (forward only)."""

    def __init__(self, channels, norm_type='bn', num_groups=16, eps=1e-5, key=None):
        self.norm_type = norm_type
        self.num_groups = num_groups
        self.channels = channels
        self.eps = eps
        if key is None:
            key = jax.random.PRNGKey(0)
        kg, kb = jax.random.split(key)
        # PyTorch default init is ones/zeros; randomized (deterministically)
        # so the affine path is actually exercised by the self-test.
        if norm_type == 'ln':
            self.gamma = jax.random.normal(kg, (1,), jnp.float32) * 0.1 + 1.0
            self.beta = jax.random.normal(kb, (1,), jnp.float32) * 0.1
        else:
            self.gamma = jax.random.normal(kg, (channels,), jnp.float32) * 0.1 + 1.0
            self.beta = jax.random.normal(kb, (channels,), jnp.float32) * 0.1

    def __call__(self, x):
        N, C, L = x.shape
        eps = self.eps
        nt = self.norm_type
        isz = x.dtype.itemsize

        if nt == 'bn':
            # TODO(synk): training-mode batch statistics only; running-mean/var
            # buffers (momentum update) and eval-mode normalization not modeled.
            # TODO(synk): if N*L is so large that an 8-channel block overflows
            # VMEM, a chunked stats+apply two-pass path would be needed.
            g = self.gamma.reshape(1, C, 1)
            b = self.beta.reshape(1, C, 1)
            c_tile = _pick_grid_tile(C, N * L * isz, sublane=True)
            return _run_norm(x, g, b, axis=1, tile=c_tile,
                             reduce_axes=(0, 2), count=N * L, eps=eps,
                             gamma_tiled=True)
        if nt == 'in':
            # TODO(synk): for tiny L an MXU block-diagonal segment-sum would
            # avoid masked partial stores; not needed for correctness.
            g = self.gamma.reshape(1, C, 1)
            b = self.beta.reshape(1, C, 1)
            n_tile = _pick_grid_tile(N, C * L * isz)
            return _run_norm(x, g, b, axis=0, tile=n_tile,
                             reduce_axes=(2,), count=L, eps=eps,
                             gamma_tiled=False)
        if nt == 'ln':
            g = self.gamma.reshape(1, 1, 1)
            b = self.beta.reshape(1, 1, 1)
            n_tile = _pick_grid_tile(N, C * L * isz)
            return _run_norm(x, g, b, axis=0, tile=n_tile,
                             reduce_axes=(1, 2), count=C * L, eps=eps,
                             gamma_tiled=False)
        if nt == 'gn':
            G = self.num_groups
            Cg = C // G
            x4 = x.reshape(N, G, Cg, L)               # free split of channel dim
            g = self.gamma.reshape(1, G, Cg, 1)       # per-channel affine, no
            b = self.beta.reshape(1, G, Cg, 1)        # (G, Cg*L) broadcast blow-up
            n_tile = _pick_grid_tile(N, C * L * isz)
            out = _run_norm(x4, g, b, axis=0, tile=n_tile,
                            reduce_axes=(2, 3), count=Cg * L, eps=eps,
                            gamma_tiled=False)
            return out.reshape(N, C, L)
        raise ValueError(f"unknown norm_type: {self.norm_type}")


def _reference(mod, x):
    """Pure-JAX reference mirroring PyTorch semantics."""
    N, C, L = x.shape
    eps = mod.eps

    def nrm(xx, g, b, axes):
        mean = jnp.mean(xx, axis=axes, keepdims=True)
        var = jnp.mean(jnp.square(xx - mean), axis=axes, keepdims=True)
        return (xx - mean) / jnp.sqrt(var + eps) * g + b

    if mod.norm_type == 'bn':
        return nrm(x, mod.gamma.reshape(1, C, 1), mod.beta.reshape(1, C, 1), (0, 2))
    if mod.norm_type == 'in':
        return nrm(x, mod.gamma.reshape(1, C, 1), mod.beta.reshape(1, C, 1), (2,))
    if mod.norm_type == 'ln':
        return nrm(x, mod.gamma.reshape(1, 1, 1), mod.beta.reshape(1, 1, 1), (1, 2))
    G = mod.num_groups
    Cg = C // G
    out = nrm(x.reshape(N, G, Cg, L),
              mod.gamma.reshape(1, G, Cg, 1),
              mod.beta.reshape(1, G, Cg, 1), (2, 3))
    return out.reshape(N, C, L)


if __name__ == "__main__":
    key = jax.random.PRNGKey(0)
    kx, kp = jax.random.split(key)

    N, C, L = 2, 16, 32
    x = jax.random.normal(kx, (N, C, L), jnp.float32)

    ok = True
    for norm_type, num_groups in [('bn', 16), ('in', 16), ('ln', 16), ('gn', 4)]:
        mod = Normalization(C, norm_type=norm_type, num_groups=num_groups, key=kp)
        out = jax.block_until_ready(mod(x))
        ref = _reference(mod, x)
        ok = ok and bool(jnp.allclose(out, ref, atol=1e-4, rtol=1e-4))
        ok = ok and (out.shape == x.shape) and (out.dtype == x.dtype)

    if ok:
        print("KERNEL_OK")
    else:
        print("MISMATCH")
</pallas_src>

<mosaic_0001>
module attributes {stable_mosaic.version = 11 : i64} {
  func.func @_norm_kernel(%arg0: i32, %arg1: memref<2x8x32xf32, #tpu.memory_space<vmem>>, %arg2: memref<1x8x1xf32, #tpu.memory_space<vmem>>, %arg3: memref<1x8x1xf32, #tpu.memory_space<vmem>>, %arg4: memref<2x8x32xf32, #tpu.memory_space<vmem>>) attributes {dimension_semantics = [#tpu.dimension_semantics<parallel>], iteration_bounds = array<i64: 2>, scalar_prefetch = 0 : i64, scratch_operands = 0 : i64, tpu.core_type = #tpu.core_type<tc>, window_params = [{transform_indices = @transform_0, window_bounds = array<i64: 2, 8, 32>}, {transform_indices = @transform_1, window_bounds = array<i64: 1, 8, 1>}, {transform_indices = @transform_2, window_bounds = array<i64: 1, 8, 1>}, {transform_indices = @transform_3, window_bounds = array<i64: 2, 8, 32>}]} {
    %c0 = arith.constant 0 : index
    %c0_0 = arith.constant 0 : index
    %c0_1 = arith.constant 0 : index
    %0 = vector.load %arg1[%c0, %c0_0, %c0_1] : memref<2x8x32xf32, #tpu.memory_space<vmem>>, vector<2x8x32xf32>
    %cst = arith.constant dense<0.000000e+00> : vector<2x8xf32>
    %1 = vector.multi_reduction <add>, %0, %cst [2] : vector<2x8x32xf32> to vector<2x8xf32>
    %2 = vector.shape_cast %1 : vector<2x8xf32> to vector<2x8x1xf32>
    %cst_2 = arith.constant dense<0.000000e+00> : vector<8x1xf32>
    %3 = vector.multi_reduction <add>, %2, %cst_2 [0] : vector<2x8x1xf32> to vector<8x1xf32>
    %4 = vector.shape_cast %3 : vector<8x1xf32> to vector<1x8x1xf32>
    %cst_3 = arith.constant 1.562500e-02 : f32
    %5 = vector.broadcast %cst_3 : f32 to vector<1x8x1xf32>
    %6 = arith.mulf %4, %5 : vector<1x8x1xf32>
    %7 = vector.broadcast %6 : vector<1x8x1xf32> to vector<2x8x32xf32>
    %8 = arith.subf %0, %7 : vector<2x8x32xf32>
    %9 = arith.mulf %8, %8 : vector<2x8x32xf32>
    %cst_4 = arith.constant dense<0.000000e+00> : vector<2x8xf32>
    %10 = vector.multi_reduction <add>, %9, %cst_4 [2] : vector<2x8x32xf32> to vector<2x8xf32>
    %11 = vector.shape_cast %10 : vector<2x8xf32> to vector<2x8x1xf32>
    %cst_5 = arith.constant dense<0.000000e+00> : vector<8x1xf32>
    %12 = vector.multi_reduction <add>, %11, %cst_5 [0] : vector<2x8x1xf32> to vector<8x1xf32>
    %13 = vector.shape_cast %12 : vector<8x1xf32> to vector<1x8x1xf32>
    %cst_6 = arith.constant 1.562500e-02 : f32
    %14 = vector.broadcast %cst_6 : f32 to vector<1x8x1xf32>
    %15 = arith.mulf %13, %14 : vector<1x8x1xf32>
    %cst_7 = arith.constant 9.99999974E-6 : f32
    %16 = vector.broadcast %cst_7 : f32 to vector<1x8x1xf32>
    %17 = arith.addf %15, %16 : vector<1x8x1xf32>
    %18 = math.rsqrt %17 : vector<1x8x1xf32>
    %c0_8 = arith.constant 0 : index
    %c0_9 = arith.constant 0 : index
    %c0_10 = arith.constant 0 : index
    %19 = vector.load %arg2[%c0_8, %c0_9, %c0_10] : memref<1x8x1xf32, #tpu.memory_space<vmem>>, vector<1x8x1xf32>
    %20 = arith.mulf %19, %18 : vector<1x8x1xf32>
    %c0_11 = arith.constant 0 : index
    %c0_12 = arith.constant 0 : index
    %c0_13 = arith.constant 0 : index
    %21 = vector.load %arg3[%c0_11, %c0_12, %c0_13] : memref<1x8x1xf32, #tpu.memory_space<vmem>>, vector<1x8x1xf32>
    %22 = vector.broadcast %20 : vector<1x8x1xf32> to vector<2x8x32xf32>
    %23 = arith.mulf %8, %22 : vector<2x8x32xf32>
    %24 = vector.broadcast %21 : vector<1x8x1xf32> to vector<2x8x32xf32>
    %25 = arith.addf %23, %24 : vector<2x8x32xf32>
    %c0_14 = arith.constant 0 : index
    %c0_15 = arith.constant 0 : index
    %c0_16 = arith.constant 0 : index
    %26 = vector.load %arg4[%c0_14, %c0_15, %c0_16] : memref<2x8x32xf32, #tpu.memory_space<vmem>>, vector<2x8x32xf32>
    tpu.vector_store %arg4[%c0_14, %c0_15, %c0_16], %25 {strides = array<i32>} : memref<2x8x32xf32, #tpu.memory_space<vmem>>, vector<2x8x32xf32>,
    return
  }
  func.func @transform_0(%arg0: i32) -> (i32, i32, i32) {
    %c0_i32 = arith.constant 0 : i32
    %c0_i32_0 = arith.constant 0 : i32
    %c0_i32_1 = arith.constant 0 : i32
    return %c0_i32, %arg0, %c0_i32_0 : i32, i32, i32
  }
  func.func @transform_1(%arg0: i32) -> (i32, i32, i32) {
    %c0_i32 = arith.constant 0 : i32
    %c0_i32_0 = arith.constant 0 : i32
    %c0_i32_1 = arith.constant 0 : i32
    return %c0_i32, %arg0, %c0_i32_0 : i32, i32, i32
  }
  func.func @transform_2(%arg0: i32) -> (i32, i32, i32) {
    %c0_i32 = arith.constant 0 : i32
    %c0_i32_0 = arith.constant 0 : i32
    %c0_i32_1 = arith.constant 0 : i32
    return %c0_i32, %arg0, %c0_i32_0 : i32, i32, i32
  }
  func.func @transform_3(%arg0: i32) -> (i32, i32, i32) {
    %c0_i32 = arith.constant 0 : i32
    %c0_i32_0 = arith.constant 0 : i32
    %c0_i32_1 = arith.constant 0 : i32
    return %c0_i32, %arg0, %c0_i32_0 : i32, i32, i32
  }
}

</mosaic_0001>

<llo_original>
// kernel: tpu_custom_call.1
$region0: #{tpu_custom_call.1}
  #allocation0 [shape = 'u32[]', space=smem, size = 0x4, offset = 0x4, fixed_abs, tag = 'smem constant byte address 0x4 - core index']
  #allocation1 [shape = 'u32[144,128]{1,0:T(1,128)}', space=vmem, size = 0x12000, scoped, tag = 'internal scratch']
  %s0 = inlined_call_operand.hbm [shape: f32[2,16,32], index: 0, kind: input, shape index: {}]
  %s1 = inlined_call_operand.hbm [shape: f32[1,16,1], index: 1, kind: input, shape index: {}]
  %s2 = inlined_call_operand.hbm [shape: f32[1,16,1], index: 2, kind: input, shape index: {}]
  %s3 = inlined_call_operand.hbm [shape: f32[2,16,32], index: 3, kind: output, shape index: {}]
  %s4 = sld [smem:[#allocation0]]
  $region57: #{tpu_custom_call.1} parent=0
    _
  %s6 = ssub.s32 1, %s4
  %s7 = scalar_select 0, %s6, %s4
  $region1: #{tpu_custom_call.1} parent=0
    #allocation2 [shape = 'u8[16384]{0}', space=vmem, size = 0x4000, scoped, tag = 'input window, operand 0']
    #allocation3 [shape = 's32[2]{0}', space=sflag, size = 0x8, scoped, tag = 'scoped memory for tpu_custom_call.1']
    #allocation4 [shape = 's32[2]{0}', space=sflag, size = 0x8, scoped, tag = 'scoped memory for tpu_custom_call.1']
    #allocation5 [shape = 'u8[8192]{0}', space=vmem, size = 0x2000, scoped, tag = 'input window, operand 1']
    #allocation6 [shape = 's32[2]{0}', space=sflag, size = 0x8, scoped, tag = 'scoped memory for tpu_custom_call.1']
    #allocation7 [shape = 'u8[8192]{0}', space=vmem, size = 0x2000, scoped, tag = 'input window, operand 2']
    #allocation8 [shape = 'u8[16384]{0}', space=vmem, size = 0x4000, scoped, tag = 'output window, operand 0']
    %8 = vsyncpa [#allocation3], 0
    %s9 = scalar_lea.sflag [#allocation3], 1
    %10 = vsyncpa %s9, 0
    %11 = vsyncpa [#allocation6], 0
    %s12 = scalar_lea.sflag [#allocation6], 1
    %13 = vsyncpa %s12, 0
    %14 = vsyncpa [#allocation4], 0
    %s15 = scalar_lea.sflag [#allocation4], 1
    %16 = vsyncpa %s15, 0
    loop: start=0, step=1, limit=4
    $region2: #{tpu_custom_call.1} parent=1 // loop_pre_header
      _
    $region3: #{tpu_custom_call.1} parent=1 // loop_header
      %s18 = sphi 0, %s22
      %p19 = scmp.ge.s32.totalorder %s18, 4
      %s28 = sphi 0, %s30
      %s31 = sphi 0, %s28
      %s32 = sphi 0, %s31
      %s48 = sphi 0, %s32
      %s54 = sphi 0, %s56
      %s57 = sphi 0, %s54
      %s58 = sphi 0, %s57
      %s74 = sphi 0, %s58
      %s80 = sphi 0, %s82
      %s83 = sphi 0, %s80
      %s84 = sphi 0, %s83
      %s100 = sphi 0, %s84
      %s106 = sphi 0, %s108
      %s109 = sphi 0, %s106
      %s110 = sphi 0, %s109
      %s126 = sphi 0, %s110
    $region4: #{tpu_custom_call.1} parent=1 // loop_header_branch
      %21 = sbr.rel (%p19) target = $region8
    $region5: #{tpu_custom_call.1} parent=1 // loop_body
      %s23 = ssub.s32 %s18, 1
      %s24 = ssub.s32 %s18, 2
      %s25 = sadd.s32 %s18, 1
      %s26 = ssub.s32 %s18, %s25
      %p27 = scmp.eq.s32.totalorder %s26, 0
      %s29 = sadd.s32 %s28, 1
      %s30 = scalar_select %p27, %s28, %s29
      %p33 = pneg %p27
      %p34 = scmp.eq.s32.totalorder %s18, 1
      %p35 = por %p33, %p34
      %p36 = scmp.ne.s32.totalorder %s28, %s31
      %p37 = scmp.eq.s32.totalorder %s18, 0
      %p38 = por %p36, %p37
      %p39 = scmp.ne.s32.totalorder %s28, %s31
      %p40 = scmp.eq.s32.totalorder %s23, 1
      %p41 = por %p39, %p40
      %p42 = scmp.ne.s32.totalorder %s31, %s32
      %p43 = scmp.eq.s32.totalorder %s23, 0
      %p44 = por %p42, %p43
      %p45 = scmp.ne.s32.totalorder %s31, %s32
      %p46 = scmp.eq.s32.totalorder %s24, 1
      %p47 = por %p45, %p46
      %p49 = scmp.ne.s32.totalorder %s32, %s48
      %p50 = scmp.eq.s32.totalorder %s24, 0
      %p51 = por %p49, %p50
      %s52 = ssub.s32 %s18, %s25
      %p53 = scmp.eq.s32.totalorder %s52, 0
      %s55 = sadd.s32 %s54, 1
      %s56 = scalar_select %p53, %s54, %s55
      %p59 = pneg %p53
      %p60 = scmp.eq.s32.totalorder %s18, 1
      %p61 = por %p59, %p60
      %p62 = scmp.ne.s32.totalorder %s54, %s57
      %p63 = scmp.eq.s32.totalorder %s18, 0
      %p64 = por %p62, %p63
      %p65 = scmp.ne.s32.totalorder %s54, %s57
      %p66 = scmp.eq.s32.totalorder %s23, 1
      %p67 = por %p65, %p66
      %p68 = scmp.ne.s32.totalorder %s57, %s58
      %p69 = scmp.eq.s32.totalorder %s23, 0
      %p70 = por %p68, %p69
      %p71 = scmp.ne.s32.totalorder %s57, %s58
      %p72 = scmp.eq.s32.totalorder %s24, 1
      %p73 = por %p71, %p72
      %p75 = scmp.ne.s32.totalorder %s58, %s74
      %p76 = scmp.eq.s32.totalorder %s24, 0
      %p77 = por %p75, %p76
      %s78 = ssub.s32 %s18, %s25
      %p79 = scmp.eq.s32.totalorder %s78, 0
      %s81 = sadd.s32 %s80, 1
      %s82 = scalar_select %p79, %s80, %s81
      %p85 = pneg %p79
      %p86 = scmp.eq.s32.totalorder %s18, 1
      %p87 = por %p85, %p86
      %p88 = scmp.ne.s32.totalorder %s80, %s83
      %p89 = scmp.eq.s32.totalorder %s18, 0
      %p90 = por %p88, %p89
      %p91 = scmp.ne.s32.totalorder %s80, %s83
      %p92 = scmp.eq.s32.totalorder %s23, 1
      %p93 = por %p91, %p92
      %p94 = scmp.ne.s32.totalorder %s83, %s84
      %p95 = scmp.eq.s32.totalorder %s23, 0
      %p96 = por %p94, %p95
      %p97 = scmp.ne.s32.totalorder %s83, %s84
      %p98 = scmp.eq.s32.totalorder %s24, 1
      %p99 = por %p97, %p98
      %p101 = scmp.ne.s32.totalorder %s84, %s100
      %p102 = scmp.eq.s32.totalorder %s24, 0
      %p103 = por %p101, %p102
      %s104 = ssub.s32 %s18, %s25
      %p105 = scmp.eq.s32.totalorder %s104, 0
      %s107 = sadd.s32 %s106, 1
      %s108 = scalar_select %p105, %s106, %s107
      %p111 = pneg %p105
      %p112 = scmp.eq.s32.totalorder %s18, 1
      %p113 = por %p111, %p112
      %p114 = scmp.ne.s32.totalorder %s106, %s109
      %p115 = scmp.eq.s32.totalorder %s18, 0
      %p116 = por %p114, %p115
      %p117 = scmp.ne.s32.totalorder %s106, %s109
      %p118 = scmp.eq.s32.totalorder %s23, 1
      %p119 = por %p117, %p118
      %p120 = scmp.ne.s32.totalorder %s109, %s110
      %p121 = scmp.eq.s32.totalorder %s23, 0
      %p122 = por %p120, %p121
      %p123 = scmp.ne.s32.totalorder %s109, %s110
      %p124 = scmp.eq.s32.totalorder %s24, 1
      %p125 = por %p123, %p124
      %p127 = scmp.ne.s32.totalorder %s110, %s126
      %p128 = scmp.eq.s32.totalorder %s24, 0
      %p129 = por %p127, %p128
      %p130 = scmp.le.s32.totalorder 1, %s18
      %p131 = scmp.lt.s32.totalorder %s18, 3
      %p132 = pnand %p130, %p131
      %p133 = pneg %p132
      // Predicated region
      $region9: #{tpu_custom_call.1} parent=5 // pred_check
        _
      $region10: #{tpu_custom_call.1} parent=5 // pred_check_branch
        %135 = sbr.rel (%p132) target = $region12
      $region11: #{tpu_custom_call.1} parent=5 // pred_region
        %s136 = ssub.s32 %s18, 1
      $region12: #{tpu_custom_call.1} parent=5 // pred_fallthru
        _
      %p137 = scmp.lt.s32.totalorder %s18, 2
      // Predicated region
      $region13: #{tpu_custom_call.1} parent=5 // pred_check
        %p138 = pneg %p137
      $region14: #{tpu_custom_call.1} parent=5 // pred_check_branch
        %140 = sbr.rel (%p138) target = $region16
      $region15: #{tpu_custom_call.1} parent=5 // pred_region
        // Predicated region
        $region17: #{tpu_custom_call.1} parent=15 // pred_check
          %p141 = pneg %p38
        $region18: #{tpu_custom_call.1} parent=15 // pred_check_branch
          %143 = sbr.rel (%p141) target = $region20
        $region19: #{tpu_custom_call.1} parent=15 // pred_region
          %s144 = sand.u32 %s28, 1
          %s145 = scalar_lea.sflag [#allocation3], %s144
          %s146 = sand.u32 %s28, 1
          %s147 = smul.addr %s146, 16
          %s148 = scalar_lea.vmem [#allocation2], %s147
          %s150 = ssub.s32 256, 256
          %151 = vsyncadd %s145, %s150
          %s152 = smul.addr %s18, 128
          %s153 = scalar_lea.hbm %s0, %s152
          %s154 = sshll.u32 %s148, 4
          %s155 = int_to_ptr.vmem [resolvable:$true] %s154
          %160 = dma.hbm_to_vmem [thread:$0]  %s153, 256, %s155, %s145, 256, 128, 8
        $region20: #{tpu_custom_call.1} parent=15 // pred_fallthru
          _
        // Predicated region
        $region21: #{tpu_custom_call.1} parent=15 // pred_check
          %p161 = pneg %p64
        $region22: #{tpu_custom_call.1} parent=15 // pred_check_branch
          %163 = sbr.rel (%p161) target = $region24
        $region23: #{tpu_custom_call.1} parent=15 // pred_region
          %s164 = sand.u32 %s18, 1
          %s165 = scalar_lea.sflag [#allocation6], %s164
          %s166 = sand.u32 %s54, 1
          %s167 = smul.addr %s166, 8
          %s168 = scalar_lea.vmem [#allocation5], %s167
          %s170 = ssub.s32 128, 128
          %171 = vsyncadd %s165, %s170
          %s172 = smul.addr %s18, 128
          %s173 = scalar_lea.hbm %s1, %s172
          %s175 = sshll.u32 %s168, 4
          %s176 = int_to_ptr.vmem [resolvable:$true] %s175
          %178 = dma.hbm_to_vmem [thread:$0]  %s173, 128, %s176, %s165
        $region24: #{tpu_custom_call.1} parent=15 // pred_fallthru
          _
        // Predicated region
        $region25: #{tpu_custom_call.1} parent=15 // pred_check
          %p179 = pneg %p90
        $region26: #{tpu_custom_call.1} parent=15 // pred_check_branch
          %181 = sbr.rel (%p179) target = $region28
        $region27: #{tpu_custom_call.1} parent=15 // pred_region
          %s182 = sand.u32 %s18, 1
          %s183 = scalar_lea.sflag [#allocation6], %s182
          %s184 = sand.u32 %s80, 1
          %s185 = smul.addr %s184, 8
          %s186 = scalar_lea.vmem [#allocation7], %s185
          %s188 = ssub.s32 128, 128
          %189 = vsyncadd %s183, %s188
          %s190 = smul.addr %s18, 128
          %s191 = scalar_lea.hbm %s2, %s190
          %s193 = sshll.u32 %s186, 4
          %s194 = int_to_ptr.vmem [resolvable:$true] %s193
          %196 = dma.hbm_to_vmem [thread:$0]  %s191, 128, %s194, %s183
        $region28: #{tpu_custom_call.1} parent=15 // pred_fallthru
          _
      $region16: #{tpu_custom_call.1} parent=5 // pred_fallthru
        _
      %p197 = scmp.le.s32.totalorder 1, %s18
      %p198 = scmp.lt.s32.totalorder %s18, 3
      %p199 = pnand %p197, %p198
      %p200 = pneg %p199
      // Predicated region
      $region29: #{tpu_custom_call.1} parent=5 // pred_check
        _
      $region30: #{tpu_custom_call.1} parent=5 // pred_check_branch
        %202 = sbr.rel (%p199) target = $region32
      $region31: #{tpu_custom_call.1} parent=5 // pred_region
        %s203 = ssub.s32 %s18, 1
        %s204 = sand.u32 %s31, 1
        %s205 = scalar_lea.sflag [#allocation3], %s204
        %s206 = sand.u32 %s31, 1
        %s207 = smul.addr %s206, 16
        %s208 = scalar_lea.vmem [#allocation2], %s207
        // Predicated region
        $region33: #{tpu_custom_call.1} parent=31 // pred_check
          %p209 = pneg %p44
        $region34: #{tpu_custom_call.1} parent=31 // pred_check_branch
          %211 = sbr.rel (%p209) target = $region36
        $region35: #{tpu_custom_call.1} parent=31 // pred_region
          %212 = dma.done %s205, 256
        $region36: #{tpu_custom_call.1} parent=31 // pred_fallthru
          _
        %s213 = sand.u32 %s23, 1
        %s214 = scalar_lea.sflag [#allocation6], %s213
        %s215 = sand.u32 %s57, 1
        %s216 = smul.addr %s215, 8
        %s217 = scalar_lea.vmem [#allocation5], %s216
        // Predicated region
        $region37: #{tpu_custom_call.1} parent=31 // pred_check
          %p218 = pneg %p70
        $region38: #{tpu_custom_call.1} parent=31 // pred_check_branch
          %220 = sbr.rel (%p218) target = $region40
        $region39: #{tpu_custom_call.1} parent=31 // pred_region
          %221 = dma.done %s214, 128
        $region40: #{tpu_custom_call.1} parent=31 // pred_fallthru
          _
        %s222 = sand.u32 %s23, 1
        %s223 = scalar_lea.sflag [#allocation6], %s222
        %s224 = sand.u32 %s83, 1
        %s225 = smul.addr %s224, 8
        %s226 = scalar_lea.vmem [#allocation7], %s225
        // Predicated region
        $region41: #{tpu_custom_call.1} parent=31 // pred_check
          %p227 = pneg %p96
        $region42: #{tpu_custom_call.1} parent=31 // pred_check_branch
          %229 = sbr.rel (%p227) target = $region44
        $region43: #{tpu_custom_call.1} parent=31 // pred_region
          %230 = dma.done %s223, 128
        $region44: #{tpu_custom_call.1} parent=31 // pred_fallthru
          _
        %s231 = sand.u32 %s31, 1
        %s232 = scalar_lea.sflag [#allocation3], %s231
        %s233 = sand.u32 %s31, 1
        %s234 = smul.addr %s233, 16
        %s235 = scalar_lea.vmem [#allocation2], %s234
        %p236 = pneg %p44
        %p237 = pneg %p41
        %s238 = sand.u32 %s23, 1
        %s239 = scalar_lea.sflag [#allocation6], %s238
        %s240 = sand.u32 %s57, 1
        %s241 = smul.addr %s240, 8
        %s242 = scalar_lea.vmem [#allocation5], %s241
        %p243 = pneg %p70
        %p244 = pneg %p67
        %s245 = sand.u32 %s23, 1
        %s246 = scalar_lea.sflag [#allocation6], %s245
        %s247 = sand.u32 %s83, 1
        %s248 = smul.addr %s247, 8
        %s249 = scalar_lea.vmem [#allocation7], %s248
        %p250 = pneg %p96
        %p251 = pneg %p93
        %p252 = pneg %p122
        %p253 = pneg %p119
        %s254 = sand.u32 %s109, 1
        %s255 = scalar_lea.sflag [#allocation4], %s254
        %s256 = sand.u32 %s109, 1
        %s257 = smul.addr %s256, 16
        %s258 = scalar_lea.vmem [#allocation8], %s257
        %v259 = vld [vmem:[%s208] sm:$0xff]
        %v260 = vld [vmem:[%s208 + $0x8] sm:$0xff]
        %vm261 = vcmask 261120
        %v262 = vsel %vm261, %v259, 0.0
        %263 = vadd.xlane.f32.xlu0 %v262
        %v264 = vpop.xlane.xlu0 %263
        %v265 = vsel %vm261, %v260, 0.0
        %266 = vadd.xlane.f32.xlu0 %v265
        %v267 = vpop.xlane.xlu0 %266
        %v268 = vadd.f32 %v264, %v267
        %v269 = vmul.f32 %v268, 0.015625
        %v270 = vsub.f32 %v259, %v269
        %v271 = vsub.f32 %v260, %v269
        %v272 = vmul.f32 %v270, %v270
        %v273 = vmul.f32 %v271, %v271
        %v274 = vsel %vm261, %v272, 0.0
        %275 = vadd.xlane.f32.xlu0 %v274
        %v276 = vpop.xlane.xlu0 %275
        %v277 = vsel %vm261, %v273, 0.0
        %278 = vadd.xlane.f32.xlu0 %v277
        %v279 = vpop.xlane.xlu0 %278
        %v280 = vadd.f32 %v276, %v279
        %v281 = vmul.f32 %v280, 0.015625
        %v282 = vadd.f32 %v281, 1e-05
        %v283 = vrsqrt.pop %v282
        %v284 = vld [vmem:[%s217] sm:$0xff]
        %v285 = vmul.f32 %v284, %v283
        %v286 = vld [vmem:[%s226] sm:$0xff]
        %288 = vset.pattern.permute.xlu0 0
        %289 = vperm.xlu0 %288, %v285
        %v290 = vpop.permute.xlu0 %289
        %v292 = vmul.f32 %v270, %v290
        %v293 = vmul.f32 %v271, %v290
        %295 = vset.pattern.permute.xlu0 0
        %296 = vperm.xlu0 %295, %v286
        %v297 = vpop.permute.xlu0 %296
        %v299 = vadd.f32 %v292, %v297
        %v300 = vadd.f32 %v293, %v297
        %301 = vst.msk [vmem:[%s258] sm:$0xff] %vm261, %v299
        %302 = vst.msk [vmem:[%s258 + $0x8] sm:$0xff] %vm261, %v300
        %s303 = sand.u32 %s109, 1
        %s304 = scalar_lea.sflag [#allocation4], %s303
        %s305 = sand.u32 %s109, 1
        %s306 = smul.addr %s305, 16
        %s307 = scalar_lea.vmem [#allocation8], %s306
        // Predicated region
        $region45: #{tpu_custom_call.1} parent=31 // pred_check
          %p308 = pneg %p119
        $region46: #{tpu_custom_call.1} parent=31 // pred_check_branch
          %310 = sbr.rel (%p308) target = $region48
        $region47: #{tpu_custom_call.1} parent=31 // pred_region
          %s312 = ssub.s32 256, 256
          %313 = vsyncadd %s304, %s312
          %s314 = smul.addr %s23, 128
          %s315 = scalar_lea.hbm %s3, %s314
          %s316 = sshll.u32 %s307, 4
          %s317 = int_to_ptr.vmem [resolvable:$true] %s316
          %322 = dma.vmem_to_hbm [thread:$0]  %s317, 256, %s315, %s304, 128, 256, 8
        $region48: #{tpu_custom_call.1} parent=31 // pred_fallthru
          _
      $region32: #{tpu_custom_call.1} parent=5 // pred_fallthru
        _
      %p323 = scmp.le.s32.totalorder 2, %s18
      // Predicated region
      $region49: #{tpu_custom_call.1} parent=5 // pred_check
        %p324 = pneg %p323
      $region50: #{tpu_custom_call.1} parent=5 // pred_check_branch
        %326 = sbr.rel (%p324) target = $region52
      $region51: #{tpu_custom_call.1} parent=5 // pred_region
        %s327 = ssub.s32 %s18, 2
        // Predicated region
        $region53: #{tpu_custom_call.1} parent=51 // pred_check
          %p328 = pneg %p125
        $region54: #{tpu_custom_call.1} parent=51 // pred_check_branch
          %330 = sbr.rel (%p328) target = $region56
        $region55: #{tpu_custom_call.1} parent=51 // pred_region
          %s331 = sand.u32 %s110, 1
          %s332 = scalar_lea.sflag [#allocation4], %s331
          %s333 = sand.u32 %s110, 1
          %s334 = smul.addr %s333, 16
          %s335 = scalar_lea.vmem [#allocation8], %s334
          %336 = dma.done %s332, 256
        $region56: #{tpu_custom_call.1} parent=51 // pred_fallthru
          _
      $region52: #{tpu_custom_call.1} parent=5 // pred_fallthru
        _
    $region6: #{tpu_custom_call.1} parent=1 // loop_footer
      %s22 = sadd.s32 1, %s18
    $region7: #{tpu_custom_call.1} parent=1 // loop_footer_branch
      %17 = sbr.rel target = $region3
    $region8: #{tpu_custom_call.1} parent=1 // loop_exit
      _
    %337 = vsyncpa [#allocation3], 1
    %s338 = scalar_lea.sflag [#allocation3], 1
    %339 = vsyncpa %s338, 1
    %340 = vsyncpa [#allocation6], 1
    %s341 = scalar_lea.sflag [#allocation6], 1
    %342 = vsyncpa %s341, 1
    %343 = vsyncpa [#allocation4], 1
    %s344 = scalar_lea.sflag [#allocation4], 1
    %345 = vsyncpa %s344, 1

</llo_original>
